<compile_context>
chip_gen: v7x
topology: tpu7x:2x2x1
jax: 0.10.0
libtpu: 0.0.40
codegen_flags: <defaults>
</compile_context>

<pallas_src>
import functools

import jax
import jax.numpy as jnp
from jax.experimental import pallas as pl
from jax.experimental.pallas import tpu as pltpu


def _log_sigmoid(x):
    # Numerically stable logsigmoid(x) = min(x, 0) - log1p(exp(-|x|)),
    # matching torch.nn.functional.logsigmoid.
    return jnp.minimum(x, 0.0) - jnp.log1p(jnp.exp(-jnp.abs(x)))


def _sgns_kernel(f_ref, out_ref, *, n_neg, emb):
    # f_ref: ((K+2)*E, tile_b)  batch-on-lanes feature slab
    #   rows [0, E)          -> input-word embedding  x
    #   rows [E, 2E)         -> context-word embedding y
    #   rows [(2+k)E, (3+k)E) -> k-th negative-sample embedding n_k
    x = f_ref[pl.ds(0, emb), :].astype(jnp.float32)          # (E, tile_b)
    y = f_ref[pl.ds(emb, emb), :].astype(jnp.float32)        # (E, tile_b)

    # Positive term: mean_e logsigmoid(x_e * y_e) (elementwise, as in the
    # PyTorch reference); the 1/E is folded into one scale.
    pos = jnp.sum(_log_sigmoid(x * y), axis=0, keepdims=True) * (1.0 / emb)   # (1, tile_b)

    # Negative term: sum_k logsigmoid(-<n_k, x>).  Sublane slices at multiples
    # of E are free; the mul is dense VPU work; the reduce is over sublanes.
    neg = jnp.zeros_like(pos)
    for k in range(n_neg):
        nk = f_ref[pl.ds((2 + k) * emb, emb), :].astype(jnp.float32)          # (E, tile_b)
        sk = jnp.sum(nk * x, axis=0, keepdims=True)                           # (1, tile_b)
        neg = neg + _log_sigmoid(-sk)

    per_example = pos + neg                                                   # (1, tile_b)
    # Broadcast over sublanes so the store is a plain lane-dense vst; the
    # wrapper reads row 0.
    out_ref[...] = jnp.broadcast_to(per_example, out_ref.shape).astype(out_ref.dtype)


def _plan_tiles(batch, feat_dim, emb, itemsize):
    """Pick the lane tile (batch columns per grid step) and padded batch."""
    # Honest per-column VMEM accounting: the streamed block is double-buffered
    # by the Pallas pipeline, plus a handful of (E, tile) f32 temporaries
    # (x, y, n_k, products) live inside the kernel body.
    per_col = feat_dim * 2 * itemsize + 8 * emb * 4
    budget = 16 * 1024 * 1024            # accounted usage; limit set to 32 MiB below
    max_cols = max(128, (budget // per_col) // 128 * 128)
    max_cols = min(max_cols, 4096)
    # Keep >= 2 grid steps when the batch allows so the "parallel" axis can be
    # split across both v7x TensorCores (v5e/v6e have 1 TC, unaffected).
    min_tiles = 2 if batch >= 256 else 1
    num_tiles = max(min_tiles, pl.cdiv(batch, max_cols))
    if num_tiles == 1:
        return batch, batch, 1           # single full-width block, no padding
    tile = pl.cdiv(pl.cdiv(batch, num_tiles), 128) * 128
    return tile, num_tiles * tile, num_tiles


def skip_gram_ns_loss(input_vecs, ctx_vecs, neg_vecs):
    """SGNS loss: -mean_b( mean_e logsig(x*y) + sum_k logsig(-<n_k, x>) ).

    input_vecs: (B, E)  input-word embeddings
    ctx_vecs:   (B, E)  context-word embeddings
    neg_vecs:   (B, K, E) negative-sample embeddings (NOT pre-negated)
    Pass bf16 arrays to halve HBM traffic; in-kernel compute is always f32.
    """
    batch, emb = input_vecs.shape
    n_neg = neg_vecs.shape[1]
    feat_dim = (n_neg + 2) * emb

    # Batch-on-lanes slab: (F, B) with F = (K+2)*E.  Gather/concat/transpose
    # are layout plumbing outside the kernel (XLA fuses them into one copy).
    neg_t = jnp.transpose(neg_vecs, (1, 2, 0)).reshape(n_neg * emb, batch)
    feats = jnp.concatenate([input_vecs.T, ctx_vecs.T, neg_t], axis=0)

    tile_b, b_pad, num_tiles = _plan_tiles(batch, feat_dim, emb,
                                           feats.dtype.itemsize)
    if b_pad != batch:
        feats = jnp.pad(feats, ((0, 0), (0, b_pad - batch)))

    kernel = functools.partial(_sgns_kernel, n_neg=n_neg, emb=emb)

    cost = pl.CostEstimate(
        flops=batch * (3 * emb + 2 * n_neg * emb + 6 * n_neg + 6),
        transcendentals=2 * batch * (emb + n_neg),
        bytes_accessed=feat_dim * b_pad * feats.dtype.itemsize + 8 * b_pad * 4,
    )

    per_example = pl.pallas_call(
        kernel,
        out_shape=jax.ShapeDtypeStruct((8, b_pad), jnp.float32),
        grid=(num_tiles,),
        in_specs=[pl.BlockSpec((feat_dim, tile_b), lambda i: (0, i))],
        out_specs=pl.BlockSpec((8, tile_b), lambda i: (0, i)),
        compiler_params=pltpu.CompilerParams(
            dimension_semantics=("parallel",),
            vmem_limit_bytes=32 * 1024 * 1024,
        ),
        cost_estimate=cost,
    )(feats)

    # loss = -mean_b(pos_loss + neg_loss); padded columns sliced off first.
    return -jnp.sum(per_example[0, :batch]) / batch


def _ref_loss(x, y, n):
    # Pure-JAX reference mirroring the PyTorch forward.
    pos = jnp.mean(_log_sigmoid(x * y), axis=1)
    s = jnp.einsum('bke,be->bk', n, x, precision=jax.lax.Precision.HIGHEST)
    neg = jnp.sum(_log_sigmoid(-s), axis=1)
    return -jnp.mean(pos + neg)


if __name__ == "__main__":
    # Small, forward-consistent shapes.
    vocab_size = 50
    embedding_size = 32
    negative_sample_size = 8
    batch = 8

    key = jax.random.PRNGKey(0)
    k_in, k_out, k_freq, k_iw, k_cw, k_neg = jax.random.split(key, 6)

    # Parameter init: U(-0.5/E, 0.5/E) as in _init_weights().
    bound = 0.5 / embedding_size
    input_embedding = jax.random.uniform(
        k_in, (vocab_size, embedding_size), jnp.float32, -bound, bound)
    output_embedding = jax.random.uniform(
        k_out, (vocab_size, embedding_size), jnp.float32, -bound, bound)

    # word_frequency ** 0.75, normalized (as done in __init__).
    word_frequency = jax.random.uniform(k_freq, (vocab_size,), jnp.float32, 0.1, 1.0)
    wf = jnp.power(word_frequency, 0.75)
    wf = wf / jnp.sum(wf)

    # (input_word, context_word) batch.
    input_word = jax.random.randint(k_iw, (batch,), 0, vocab_size)
    context_word = jax.random.randint(k_cw, (batch,), 0, vocab_size)

    # torch.multinomial(word_frequency, B*K, replacement=True).view(B, K)
    neg_idx = jax.random.categorical(
        k_neg, jnp.log(wf), shape=(batch, negative_sample_size))

    # Embedding gathers (glue, outside the kernel -- see TODO at top).
    input_vecs = input_embedding[input_word]        # (B, E)
    ctx_vecs = output_embedding[context_word]       # (B, E)
    neg_vecs = output_embedding[neg_idx]            # (B, K, E)

    loss = skip_gram_ns_loss(input_vecs, ctx_vecs, neg_vecs)
    jax.block_until_ready(loss)

    ref = _ref_loss(input_vecs, ctx_vecs, neg_vecs)
    assert abs(float(loss) - float(ref)) < 1e-4 * max(1.0, abs(float(ref))), (
        float(loss), float(ref))
    print("KERNEL_OK")
</pallas_src>

<mosaic_0001>
module attributes {stable_mosaic.version = 11 : i64} {
  func.func @_sgns_kernel(%arg0: i32, %arg1: memref<320x8xf32, #tpu.memory_space<vmem>>, %arg2: memref<8x8xf32, #tpu.memory_space<vmem>>) attributes {dimension_semantics = [#tpu.dimension_semantics<parallel>], iteration_bounds = array<i64: 1>, scalar_prefetch = 0 : i64, scratch_operands = 0 : i64, tpu.core_type = #tpu.core_type<tc>, window_params = [{transform_indices = @transform_0, window_bounds = array<i64: 320, 8>}, {transform_indices = @transform_1, window_bounds = array<i64: 8, 8>}]} {
    %c0 = arith.constant 0 : index
    %c0_0 = arith.constant 0 : index
    %0 = vector.load %arg1[%c0, %c0_0] : memref<320x8xf32, #tpu.memory_space<vmem>>, vector<32x8xf32>
    %c32 = arith.constant 32 : index
    %c0_1 = arith.constant 0 : index
    %1 = vector.load %arg1[%c32, %c0_1] : memref<320x8xf32, #tpu.memory_space<vmem>>, vector<32x8xf32>
    %2 = arith.mulf %0, %1 : vector<32x8xf32>
    %cst = arith.constant 0.000000e+00 : f32
    %3 = vector.broadcast %cst : f32 to vector<32x8xf32>
    %4 = arith.minimumf %2, %3 : vector<32x8xf32>
    %5 = math.absf %2 : vector<32x8xf32>
    %cst_2 = arith.constant 0.000000e+00 : f32
    %6 = vector.broadcast %cst_2 : f32 to vector<32x8xf32>
    %7 = arith.subf %6, %5 : vector<32x8xf32>
    %8 = math.exp %7 : vector<32x8xf32>
    %9 = math.log1p %8 : vector<32x8xf32>
    %10 = arith.subf %4, %9 : vector<32x8xf32>
    %cst_3 = arith.constant dense<0.000000e+00> : vector<8xf32>
    %11 = vector.multi_reduction <add>, %10, %cst_3 [0] : vector<32x8xf32> to vector<8xf32>
    %12 = vector.shape_cast %11 : vector<8xf32> to vector<1x8xf32>
    %cst_4 = arith.constant 3.125000e-02 : f32
    %13 = vector.broadcast %cst_4 : f32 to vector<1x8xf32>
    %14 = arith.mulf %12, %13 : vector<1x8xf32>
    %cst_5 = arith.constant 0.000000e+00 : f32
    %15 = vector.broadcast %cst_5 : f32 to vector<1x8xf32>
    %c64 = arith.constant 64 : index
    %c0_6 = arith.constant 0 : index
    %16 = vector.load %arg1[%c64, %c0_6] : memref<320x8xf32, #tpu.memory_space<vmem>>, vector<32x8xf32>
    %17 = arith.mulf %16, %0 : vector<32x8xf32>
    %cst_7 = arith.constant dense<0.000000e+00> : vector<8xf32>
    %18 = vector.multi_reduction <add>, %17, %cst_7 [0] : vector<32x8xf32> to vector<8xf32>
    %19 = vector.shape_cast %18 : vector<8xf32> to vector<1x8xf32>
    %cst_8 = arith.constant 0.000000e+00 : f32
    %20 = vector.broadcast %cst_8 : f32 to vector<1x8xf32>
    %21 = arith.subf %20, %19 : vector<1x8xf32>
    %cst_9 = arith.constant 0.000000e+00 : f32
    %22 = vector.broadcast %cst_9 : f32 to vector<1x8xf32>
    %23 = arith.minimumf %21, %22 : vector<1x8xf32>
    %24 = math.absf %21 : vector<1x8xf32>
    %cst_10 = arith.constant 0.000000e+00 : f32
    %25 = vector.broadcast %cst_10 : f32 to vector<1x8xf32>
    %26 = arith.subf %25, %24 : vector<1x8xf32>
    %27 = math.exp %26 : vector<1x8xf32>
    %28 = math.log1p %27 : vector<1x8xf32>
    %29 = arith.subf %23, %28 : vector<1x8xf32>
    %30 = arith.addf %15, %29 : vector<1x8xf32>
    %c96 = arith.constant 96 : index
    %c0_11 = arith.constant 0 : index
    %31 = vector.load %arg1[%c96, %c0_11] : memref<320x8xf32, #tpu.memory_space<vmem>>, vector<32x8xf32>
    %32 = arith.mulf %31, %0 : vector<32x8xf32>
    %cst_12 = arith.constant dense<0.000000e+00> : vector<8xf32>
    %33 = vector.multi_reduction <add>, %32, %cst_12 [0] : vector<32x8xf32> to vector<8xf32>
    %34 = vector.shape_cast %33 : vector<8xf32> to vector<1x8xf32>
    %cst_13 = arith.constant 0.000000e+00 : f32
    %35 = vector.broadcast %cst_13 : f32 to vector<1x8xf32>
    %36 = arith.subf %35, %34 : vector<1x8xf32>
    %cst_14 = arith.constant 0.000000e+00 : f32
    %37 = vector.broadcast %cst_14 : f32 to vector<1x8xf32>
    %38 = arith.minimumf %36, %37 : vector<1x8xf32>
    %39 = math.absf %36 : vector<1x8xf32>
    %cst_15 = arith.constant 0.000000e+00 : f32
    %40 = vector.broadcast %cst_15 : f32 to vector<1x8xf32>
    %41 = arith.subf %40, %39 : vector<1x8xf32>
    %42 = math.exp %41 : vector<1x8xf32>
    %43 = math.log1p %42 : vector<1x8xf32>
    %44 = arith.subf %38, %43 : vector<1x8xf32>
    %45 = arith.addf %30, %44 : vector<1x8xf32>
    %c128 = arith.constant 128 : index
    %c0_16 = arith.constant 0 : index
    %46 = vector.load %arg1[%c128, %c0_16] : memref<320x8xf32, #tpu.memory_space<vmem>>, vector<32x8xf32>
    %47 = arith.mulf %46, %0 : vector<32x8xf32>
    %cst_17 = arith.constant dense<0.000000e+00> : vector<8xf32>
    %48 = vector.multi_reduction <add>, %47, %cst_17 [0] : vector<32x8xf32> to vector<8xf32>
    %49 = vector.shape_cast %48 : vector<8xf32> to vector<1x8xf32>
    %cst_18 = arith.constant 0.000000e+00 : f32
    %50 = vector.broadcast %cst_18 : f32 to vector<1x8xf32>
    %51 = arith.subf %50, %49 : vector<1x8xf32>
    %cst_19 = arith.constant 0.000000e+00 : f32
    %52 = vector.broadcast %cst_19 : f32 to vector<1x8xf32>
    %53 = arith.minimumf %51, %52 : vector<1x8xf32>
    %54 = math.absf %51 : vector<1x8xf32>
    %cst_20 = arith.constant 0.000000e+00 : f32
    %55 = vector.broadcast %cst_20 : f32 to vector<1x8xf32>
    %56 = arith.subf %55, %54 : vector<1x8xf32>
    %57 = math.exp %56 : vector<1x8xf32>
    %58 = math.log1p %57 : vector<1x8xf32>
    %59 = arith.subf %53, %58 : vector<1x8xf32>
    %60 = arith.addf %45, %59 : vector<1x8xf32>
    %c160 = arith.constant 160 : index
    %c0_21 = arith.constant 0 : index
    %61 = vector.load %arg1[%c160, %c0_21] : memref<320x8xf32, #tpu.memory_space<vmem>>, vector<32x8xf32>
    %62 = arith.mulf %61, %0 : vector<32x8xf32>
    %cst_22 = arith.constant dense<0.000000e+00> : vector<8xf32>
    %63 = vector.multi_reduction <add>, %62, %cst_22 [0] : vector<32x8xf32> to vector<8xf32>
    %64 = vector.shape_cast %63 : vector<8xf32> to vector<1x8xf32>
    %cst_23 = arith.constant 0.000000e+00 : f32
    %65 = vector.broadcast %cst_23 : f32 to vector<1x8xf32>
    %66 = arith.subf %65, %64 : vector<1x8xf32>
    %cst_24 = arith.constant 0.000000e+00 : f32
    %67 = vector.broadcast %cst_24 : f32 to vector<1x8xf32>
    %68 = arith.minimumf %66, %67 : vector<1x8xf32>
    %69 = math.absf %66 : vector<1x8xf32>
    %cst_25 = arith.constant 0.000000e+00 : f32
    %70 = vector.broadcast %cst_25 : f32 to vector<1x8xf32>
    %71 = arith.subf %70, %69 : vector<1x8xf32>
    %72 = math.exp %71 : vector<1x8xf32>
    %73 = math.log1p %72 : vector<1x8xf32>
    %74 = arith.subf %68, %73 : vector<1x8xf32>
    %75 = arith.addf %60, %74 : vector<1x8xf32>
    %c192 = arith.constant 192 : index
    %c0_26 = arith.constant 0 : index
    %76 = vector.load %arg1[%c192, %c0_26] : memref<320x8xf32, #tpu.memory_space<vmem>>, vector<32x8xf32>
    %77 = arith.mulf %76, %0 : vector<32x8xf32>
    %cst_27 = arith.constant dense<0.000000e+00> : vector<8xf32>
    %78 = vector.multi_reduction <add>, %77, %cst_27 [0] : vector<32x8xf32> to vector<8xf32>
    %79 = vector.shape_cast %78 : vector<8xf32> to vector<1x8xf32>
    %cst_28 = arith.constant 0.000000e+00 : f32
    %80 = vector.broadcast %cst_28 : f32 to vector<1x8xf32>
    %81 = arith.subf %80, %79 : vector<1x8xf32>
    %cst_29 = arith.constant 0.000000e+00 : f32
    %82 = vector.broadcast %cst_29 : f32 to vector<1x8xf32>
    %83 = arith.minimumf %81, %82 : vector<1x8xf32>
    %84 = math.absf %81 : vector<1x8xf32>
    %cst_30 = arith.constant 0.000000e+00 : f32
    %85 = vector.broadcast %cst_30 : f32 to vector<1x8xf32>
    %86 = arith.subf %85, %84 : vector<1x8xf32>
    %87 = math.exp %86 : vector<1x8xf32>
    %88 = math.log1p %87 : vector<1x8xf32>
    %89 = arith.subf %83, %88 : vector<1x8xf32>
    %90 = arith.addf %75, %89 : vector<1x8xf32>
    %c224 = arith.constant 224 : index
    %c0_31 = arith.constant 0 : index
    %91 = vector.load %arg1[%c224, %c0_31] : memref<320x8xf32, #tpu.memory_space<vmem>>, vector<32x8xf32>
    %92 = arith.mulf %91, %0 : vector<32x8xf32>
    %cst_32 = arith.constant dense<0.000000e+00> : vector<8xf32>
    %93 = vector.multi_reduction <add>, %92, %cst_32 [0] : vector<32x8xf32> to vector<8xf32>
    %94 = vector.shape_cast %93 : vector<8xf32> to vector<1x8xf32>
    %cst_33 = arith.constant 0.000000e+00 : f32
    %95 = vector.broadcast %cst_33 : f32 to vector<1x8xf32>
    %96 = arith.subf %95, %94 : vector<1x8xf32>
    %cst_34 = arith.constant 0.000000e+00 : f32
    %97 = vector.broadcast %cst_34 : f32 to vector<1x8xf32>
    %98 = arith.minimumf %96, %97 : vector<1x8xf32>
    %99 = math.absf %96 : vector<1x8xf32>
    %cst_35 = arith.constant 0.000000e+00 : f32
    %100 = vector.broadcast %cst_35 : f32 to vector<1x8xf32>
    %101 = arith.subf %100, %99 : vector<1x8xf32>
    %102 = math.exp %101 : vector<1x8xf32>
    %103 = math.log1p %102 : vector<1x8xf32>
    %104 = arith.subf %98, %103 : vector<1x8xf32>
    %105 = arith.addf %90, %104 : vector<1x8xf32>
    %c256 = arith.constant 256 : index
    %c0_36 = arith.constant 0 : index
    %106 = vector.load %arg1[%c256, %c0_36] : memref<320x8xf32, #tpu.memory_space<vmem>>, vector<32x8xf32>
    %107 = arith.mulf %106, %0 : vector<32x8xf32>
    %cst_37 = arith.constant dense<0.000000e+00> : vector<8xf32>
    %108 = vector.multi_reduction <add>, %107, %cst_37 [0] : vector<32x8xf32> to vector<8xf32>
    %109 = vector.shape_cast %108 : vector<8xf32> to vector<1x8xf32>
    %cst_38 = arith.constant 0.000000e+00 : f32
    %110 = vector.broadcast %cst_38 : f32 to vector<1x8xf32>
    %111 = arith.subf %110, %109 : vector<1x8xf32>
    %cst_39 = arith.constant 0.000000e+00 : f32
    %112 = vector.broadcast %cst_39 : f32 to vector<1x8xf32>
    %113 = arith.minimumf %111, %112 : vector<1x8xf32>
    %114 = math.absf %111 : vector<1x8xf32>
    %cst_40 = arith.constant 0.000000e+00 : f32
    %115 = vector.broadcast %cst_40 : f32 to vector<1x8xf32>
    %116 = arith.subf %115, %114 : vector<1x8xf32>
    %117 = math.exp %116 : vector<1x8xf32>
    %118 = math.log1p %117 : vector<1x8xf32>
    %119 = arith.subf %113, %118 : vector<1x8xf32>
    %120 = arith.addf %105, %119 : vector<1x8xf32>
    %c288 = arith.constant 288 : index
    %c0_41 = arith.constant 0 : index
    %121 = vector.load %arg1[%c288, %c0_41] : memref<320x8xf32, #tpu.memory_space<vmem>>, vector<32x8xf32>
    %122 = arith.mulf %121, %0 : vector<32x8xf32>
    %cst_42 = arith.constant dense<0.000000e+00> : vector<8xf32>
    %123 = vector.multi_reduction <add>, %122, %cst_42 [0] : vector<32x8xf32> to vector<8xf32>
    %124 = vector.shape_cast %123 : vector<8xf32> to vector<1x8xf32>
    %cst_43 = arith.constant 0.000000e+00 : f32
    %125 = vector.broadcast %cst_43 : f32 to vector<1x8xf32>
    %126 = arith.subf %125, %124 : vector<1x8xf32>
    %cst_44 = arith.constant 0.000000e+00 : f32
    %127 = vector.broadcast %cst_44 : f32 to vector<1x8xf32>
    %128 = arith.minimumf %126, %127 : vector<1x8xf32>
    %129 = math.absf %126 : vector<1x8xf32>
    %cst_45 = arith.constant 0.000000e+00 : f32
    %130 = vector.broadcast %cst_45 : f32 to vector<1x8xf32>
    %131 = arith.subf %130, %129 : vector<1x8xf32>
    %132 = math.exp %131 : vector<1x8xf32>
    %133 = math.log1p %132 : vector<1x8xf32>
    %134 = arith.subf %128, %133 : vector<1x8xf32>
    %135 = arith.addf %120, %134 : vector<1x8xf32>
    %136 = arith.addf %14, %135 : vector<1x8xf32>
    %137 = vector.shape_cast %136 : vector<1x8xf32> to vector<1x8xf32>
    %138 = vector.broadcast %137 : vector<1x8xf32> to vector<8x8xf32>
    %c0_46 = arith.constant 0 : index
    %c0_47 = arith.constant 0 : index
    %139 = vector.load %arg2[%c0_46, %c0_47] : memref<8x8xf32, #tpu.memory_space<vmem>>, vector<8x8xf32>
    tpu.vector_store %arg2[%c0_46, %c0_47], %138 {strides = array<i32>} : memref<8x8xf32, #tpu.memory_space<vmem>>, vector<8x8xf32>,
    return
  }
  func.func @transform_0(%arg0: i32) -> (i32, i32) {
    %c0_i32 = arith.constant 0 : i32
    %c0_i32_0 = arith.constant 0 : i32
    return %c0_i32, %arg0 : i32, i32
  }
  func.func @transform_1(%arg0: i32) -> (i32, i32) {
    %c0_i32 = arith.constant 0 : i32
    %c0_i32_0 = arith.constant 0 : i32
    return %c0_i32, %arg0 : i32, i32
  }
}

</mosaic_0001>

<llo_original>
// kernel: tpu_custom_call.1
$region0: #{tpu_custom_call.1}
  #allocation0 [shape = 'u32[]', space=smem, size = 0x4, offset = 0x4, fixed_abs, tag = 'smem constant byte address 0x4 - core index']
  #allocation1 [shape = 'u32[144,128]{1,0:T(1,128)}', space=vmem, size = 0x12000, scoped, tag = 'internal scratch']
  %s0 = inlined_call_operand.vmem [shape: f32[320,8], index: 0, kind: input, shape index: {}]
  %s1 = inlined_call_operand.hbm [shape: f32[8,8], index: 1, kind: output, shape index: {}]
  %s2 = sld [smem:[#allocation0]]
  $region14: #{tpu_custom_call.1} parent=0
    _
  %s4 = ssub.s32 1, %s2
  %s5 = scalar_select 0, %s4, %s2
  $region1: #{tpu_custom_call.1} parent=0
    #allocation2 [shape = 'u8[4096]{0}', space=vmem, size = 0x1000, scoped, tag = 'output window, operand 0, single buffered']
    #allocation3 [shape = 's32[1]{0}', space=sflag, size = 0x4, scoped, tag = 'scoped memory for tpu_custom_call.1']
    %6 = vsyncpa [#allocation3], 0
    // Predicated region
    $region2: #{tpu_custom_call.1} parent=1 // pred_check
      _
    $region3: #{tpu_custom_call.1} parent=1 // pred_check_branch
      %8 = sbr.rel (0) target = $region5
    $region4: #{tpu_custom_call.1} parent=1 // pred_region
      _
    $region5: #{tpu_custom_call.1} parent=1 // pred_fallthru
      _
    %v9 = vld [vmem:[%s0] sm:$0xff]
    %v10 = vld [vmem:[%s0 + $0x8] sm:$0xff]
    %v11 = vld [vmem:[%s0 + $0x10] sm:$0xff]
    %v12 = vld [vmem:[%s0 + $0x18] sm:$0xff]
    %v13 = vld [vmem:[%s0 + $0x20] sm:$0xff]
    %v14 = vld [vmem:[%s0 + $0x28] sm:$0xff]
    %v15 = vld [vmem:[%s0 + $0x30] sm:$0xff]
    %v16 = vld [vmem:[%s0 + $0x38] sm:$0xff]
    %v17 = vmul.f32 %v9, %v13
    %v18 = vmul.f32 %v10, %v14
    %v19 = vmul.f32 %v11, %v15
    %v20 = vmul.f32 %v12, %v16
    %v21 = vmin.f32 %v17, 0.0
    %v22 = vmin.f32 %v18, 0.0
    %v23 = vmin.f32 %v19, 0.0
    %v24 = vmin.f32 %v20, 0.0
    %v25 = vand.u32 2147483647, %v17
    %v26 = vand.u32 2147483647, %v18
    %v27 = vand.u32 2147483647, %v19
    %v28 = vand.u32 2147483647, %v20
    %v29 = vsub.f32 0.0, %v25
    %v30 = vsub.f32 0.0, %v26
    %v31 = vsub.f32 0.0, %v27
    %v32 = vsub.f32 0.0, %v28
    %v33 = vmul.f32 %v29, 1.442695
    %v34 = vpow.pop %v33
    %v35 = vmul.f32 %v30, 1.442695
    %v36 = vpow.pop %v35
    %v37 = vmul.f32 %v31, 1.442695
    %v38 = vpow.pop %v37
    %v39 = vmul.f32 %v32, 1.442695
    %v40 = vpow.pop %v39
    %v41 = vadd.f32 %v34, 1.0
    %v42 = vlog2.pop %v41
    %v43 = vmul.f32 %v42, 0.6931472
    %v44 = vmul.f32 -0.5, %v34
    %v45 = vadd.f32 %v44, 1.0
    %v46 = vmul.f32 %v45, %v34
    %v47 = vand.u32 2147483647, %v34
    %vm48 = vcmp.lt.f32.partialorder %v47, 0.0004427343
    %v49 = vsel %vm48, %v46, %v43
    %v50 = vadd.f32 %v36, 1.0
    %v51 = vlog2.pop %v50
    %v52 = vmul.f32 %v51, 0.6931472
    %v53 = vmul.f32 -0.5, %v36
    %v54 = vadd.f32 %v53, 1.0
    %v55 = vmul.f32 %v54, %v36
    %v56 = vand.u32 2147483647, %v36
    %vm57 = vcmp.lt.f32.partialorder %v56, 0.0004427343
    %v58 = vsel %vm57, %v55, %v52
    %v59 = vadd.f32 %v38, 1.0
    %v60 = vlog2.pop %v59
    %v61 = vmul.f32 %v60, 0.6931472
    %v62 = vmul.f32 -0.5, %v38
    %v63 = vadd.f32 %v62, 1.0
    %v64 = vmul.f32 %v63, %v38
    %v65 = vand.u32 2147483647, %v38
    %vm66 = vcmp.lt.f32.partialorder %v65, 0.0004427343
    %v67 = vsel %vm66, %v64, %v61
    %v68 = vadd.f32 %v40, 1.0
    %v69 = vlog2.pop %v68
    %v70 = vmul.f32 %v69, 0.6931472
    %v71 = vmul.f32 -0.5, %v40
    %v72 = vadd.f32 %v71, 1.0
    %v73 = vmul.f32 %v72, %v40
    %v74 = vand.u32 2147483647, %v40
    %vm75 = vcmp.lt.f32.partialorder %v74, 0.0004427343
    %v76 = vsel %vm75, %v73, %v70
    %v77 = vsub.f32 %v21, %v49
    %v78 = vsub.f32 %v22, %v58
    %v79 = vsub.f32 %v23, %v67
    %v80 = vsub.f32 %v24, %v76
    %vm81 = vcmask 64512
    %v82 = vsel %vm81, %v77, 0.0
    %v83 = vsel %vm81, %v78, 0.0
    %v84 = vadd.f32 %v82, %v83
    %v85 = vsel %vm81, %v79, 0.0
    %v86 = vadd.f32 %v84, %v85
    %v87 = vsel %vm81, %v80, 0.0
    %v88 = vadd.f32 %v86, %v87
    %v89 = vrot.slane %v88, 4
    %v90 = vadd.f32 %v88, %v89
    %v91 = vrot.slane %v90, 2
    %v92 = vadd.f32 %v90, %v91
    %v93 = vrot.slane %v92, 1
    %v94 = vadd.f32 %v92, %v93
    %v95 = vmul.f32 %v94, 0.03125
    %v96 = vld [vmem:[%s0 + $0x40] sm:$0xff]
    %v97 = vld [vmem:[%s0 + $0x48] sm:$0xff]
    %v98 = vld [vmem:[%s0 + $0x50] sm:$0xff]
    %v99 = vld [vmem:[%s0 + $0x58] sm:$0xff]
    %v100 = vmul.f32 %v96, %v9
    %v101 = vmul.f32 %v97, %v10
    %v102 = vmul.f32 %v98, %v11
    %v103 = vmul.f32 %v99, %v12
    %v104 = vsel %vm81, %v100, 0.0
    %v105 = vsel %vm81, %v101, 0.0
    %v106 = vadd.f32 %v104, %v105
    %v107 = vsel %vm81, %v102, 0.0
    %v108 = vadd.f32 %v106, %v107
    %v109 = vsel %vm81, %v103, 0.0
    %v110 = vadd.f32 %v108, %v109
    %v111 = vrot.slane %v110, 4
    %v112 = vadd.f32 %v110, %v111
    %v113 = vrot.slane %v112, 2
    %v114 = vadd.f32 %v112, %v113
    %v115 = vrot.slane %v114, 1
    %v116 = vadd.f32 %v114, %v115
    %v117 = vsub.f32 0.0, %v116
    %v118 = vmin.f32 %v117, 0.0
    %v119 = vand.u32 2147483647, %v117
    %v120 = vsub.f32 0.0, %v119
    %v121 = vmul.f32 %v120, 1.442695
    %v122 = vpow.pop %v121
    %v123 = vadd.f32 %v122, 1.0
    %v124 = vlog2.pop %v123
    %v125 = vmul.f32 %v124, 0.6931472
    %v126 = vmul.f32 -0.5, %v122
    %v127 = vadd.f32 %v126, 1.0
    %v128 = vmul.f32 %v127, %v122
    %v129 = vand.u32 2147483647, %v122
    %vm130 = vcmp.lt.f32.partialorder %v129, 0.0004427343
    %v131 = vsel %vm130, %v128, %v125
    %v132 = vsub.f32 %v118, %v131
    %v133 = vadd.f32 %v132, 0.0
    %v134 = vld [vmem:[%s0 + $0x60] sm:$0xff]
    %v135 = vld [vmem:[%s0 + $0x68] sm:$0xff]
    %v136 = vld [vmem:[%s0 + $0x70] sm:$0xff]
    %v137 = vld [vmem:[%s0 + $0x78] sm:$0xff]
    %v138 = vmul.f32 %v134, %v9
    %v139 = vmul.f32 %v135, %v10
    %v140 = vmul.f32 %v136, %v11
    %v141 = vmul.f32 %v137, %v12
    %v142 = vsel %vm81, %v138, 0.0
    %v143 = vsel %vm81, %v139, 0.0
    %v144 = vadd.f32 %v142, %v143
    %v145 = vsel %vm81, %v140, 0.0
    %v146 = vadd.f32 %v144, %v145
    %v147 = vsel %vm81, %v141, 0.0
    %v148 = vadd.f32 %v146, %v147
    %v149 = vrot.slane %v148, 4
    %v150 = vadd.f32 %v148, %v149
    %v151 = vrot.slane %v150, 2
    %v152 = vadd.f32 %v150, %v151
    %v153 = vrot.slane %v152, 1
    %v154 = vadd.f32 %v152, %v153
    %v155 = vsub.f32 0.0, %v154
    %v156 = vmin.f32 %v155, 0.0
    %v157 = vand.u32 2147483647, %v155
    %v158 = vsub.f32 0.0, %v157
    %v159 = vmul.f32 %v158, 1.442695
    %v160 = vpow.pop %v159
    %v161 = vadd.f32 %v160, 1.0
    %v162 = vlog2.pop %v161
    %v163 = vmul.f32 %v162, 0.6931472
    %v164 = vmul.f32 -0.5, %v160
    %v165 = vadd.f32 %v164, 1.0
    %v166 = vmul.f32 %v165, %v160
    %v167 = vand.u32 2147483647, %v160
    %vm168 = vcmp.lt.f32.partialorder %v167, 0.0004427343
    %v169 = vsel %vm168, %v166, %v163
    %v170 = vsub.f32 %v156, %v169
    %v171 = vadd.f32 %v133, %v170
    %v172 = vld [vmem:[%s0 + $0x80] sm:$0xff]
    %v173 = vld [vmem:[%s0 + $0x88] sm:$0xff]
    %v174 = vld [vmem:[%s0 + $0x90] sm:$0xff]
    %v175 = vld [vmem:[%s0 + $0x98] sm:$0xff]
    %v176 = vmul.f32 %v172, %v9
    %v177 = vmul.f32 %v173, %v10
    %v178 = vmul.f32 %v174, %v11
    %v179 = vmul.f32 %v175, %v12
    %v180 = vsel %vm81, %v176, 0.0
    %v181 = vsel %vm81, %v177, 0.0
    %v182 = vadd.f32 %v180, %v181
    %v183 = vsel %vm81, %v178, 0.0
    %v184 = vadd.f32 %v182, %v183
    %v185 = vsel %vm81, %v179, 0.0
    %v186 = vadd.f32 %v184, %v185
    %v187 = vrot.slane %v186, 4
    %v188 = vadd.f32 %v186, %v187
    %v189 = vrot.slane %v188, 2
    %v190 = vadd.f32 %v188, %v189
    %v191 = vrot.slane %v190, 1
    %v192 = vadd.f32 %v190, %v191
    %v193 = vsub.f32 0.0, %v192
    %v194 = vmin.f32 %v193, 0.0
    %v195 = vand.u32 2147483647, %v193
    %v196 = vsub.f32 0.0, %v195
    %v197 = vmul.f32 %v196, 1.442695
    %v198 = vpow.pop %v197
    %v199 = vadd.f32 %v198, 1.0
    %v200 = vlog2.pop %v199
    %v201 = vmul.f32 %v200, 0.6931472
    %v202 = vmul.f32 -0.5, %v198
    %v203 = vadd.f32 %v202, 1.0
    %v204 = vmul.f32 %v203, %v198
    %v205 = vand.u32 2147483647, %v198
    %vm206 = vcmp.lt.f32.partialorder %v205, 0.0004427343
    %v207 = vsel %vm206, %v204, %v201
    %v208 = vsub.f32 %v194, %v207
    %v209 = vadd.f32 %v171, %v208
    %v210 = vld [vmem:[%s0 + $0xa0] sm:$0xff]
    %v211 = vld [vmem:[%s0 + $0xa8] sm:$0xff]
    %v212 = vld [vmem:[%s0 + $0xb0] sm:$0xff]
    %v213 = vld [vmem:[%s0 + $0xb8] sm:$0xff]
    %v214 = vmul.f32 %v210, %v9
    %v215 = vmul.f32 %v211, %v10
    %v216 = vmul.f32 %v212, %v11
    %v217 = vmul.f32 %v213, %v12
    %v218 = vsel %vm81, %v214, 0.0
    %v219 = vsel %vm81, %v215, 0.0
    %v220 = vadd.f32 %v218, %v219
    %v221 = vsel %vm81, %v216, 0.0
    %v222 = vadd.f32 %v220, %v221
    %v223 = vsel %vm81, %v217, 0.0
    %v224 = vadd.f32 %v222, %v223
    %v225 = vrot.slane %v224, 4
    %v226 = vadd.f32 %v224, %v225
    %v227 = vrot.slane %v226, 2
    %v228 = vadd.f32 %v226, %v227
    %v229 = vrot.slane %v228, 1
    %v230 = vadd.f32 %v228, %v229
    %v231 = vsub.f32 0.0, %v230
    %v232 = vmin.f32 %v231, 0.0
    %v233 = vand.u32 2147483647, %v231
    %v234 = vsub.f32 0.0, %v233
    %v235 = vmul.f32 %v234, 1.442695
    %v236 = vpow.pop %v235
    %v237 = vadd.f32 %v236, 1.0
    %v238 = vlog2.pop %v237
    %v239 = vmul.f32 %v238, 0.6931472
    %v240 = vmul.f32 -0.5, %v236
    %v241 = vadd.f32 %v240, 1.0
    %v242 = vmul.f32 %v241, %v236
    %v243 = vand.u32 2147483647, %v236
    %vm244 = vcmp.lt.f32.partialorder %v243, 0.0004427343
    %v245 = vsel %vm244, %v242, %v239
    %v246 = vsub.f32 %v232, %v245
    %v247 = vadd.f32 %v209, %v246
    %v248 = vld [vmem:[%s0 + $0xc0] sm:$0xff]
    %v249 = vld [vmem:[%s0 + $0xc8] sm:$0xff]
    %v250 = vld [vmem:[%s0 + $0xd0] sm:$0xff]
    %v251 = vld [vmem:[%s0 + $0xd8] sm:$0xff]
    %v252 = vmul.f32 %v248, %v9
    %v253 = vmul.f32 %v249, %v10
    %v254 = vmul.f32 %v250, %v11
    %v255 = vmul.f32 %v251, %v12
    %v256 = vsel %vm81, %v252, 0.0
    %v257 = vsel %vm81, %v253, 0.0
    %v258 = vadd.f32 %v256, %v257
    %v259 = vsel %vm81, %v254, 0.0
    %v260 = vadd.f32 %v258, %v259
    %v261 = vsel %vm81, %v255, 0.0
    %v262 = vadd.f32 %v260, %v261
    %v263 = vrot.slane %v262, 4
    %v264 = vadd.f32 %v262, %v263
    %v265 = vrot.slane %v264, 2
    %v266 = vadd.f32 %v264, %v265
    %v267 = vrot.slane %v266, 1
    %v268 = vadd.f32 %v266, %v267
    %v269 = vsub.f32 0.0, %v268
    %v270 = vmin.f32 %v269, 0.0
    %v271 = vand.u32 2147483647, %v269
    %v272 = vsub.f32 0.0, %v271
    %v273 = vmul.f32 %v272, 1.442695
    %v274 = vpow.pop %v273
    %v275 = vadd.f32 %v274, 1.0
    %v276 = vlog2.pop %v275
    %v277 = vmul.f32 %v276, 0.6931472
    %v278 = vmul.f32 -0.5, %v274
    %v279 = vadd.f32 %v278, 1.0
    %v280 = vmul.f32 %v279, %v274
    %v281 = vand.u32 2147483647, %v274
    %vm282 = vcmp.lt.f32.partialorder %v281, 0.0004427343
    %v283 = vsel %vm282, %v280, %v277
    %v284 = vsub.f32 %v270, %v283
    %v285 = vadd.f32 %v247, %v284
    %v286 = vld [vmem:[%s0 + $0xe0] sm:$0xff]
    %v287 = vld [vmem:[%s0 + $0xe8] sm:$0xff]
    %v288 = vld [vmem:[%s0 + $0xf0] sm:$0xff]
    %v289 = vld [vmem:[%s0 + $0xf8] sm:$0xff]
    %v290 = vmul.f32 %v286, %v9
    %v291 = vmul.f32 %v287, %v10
    %v292 = vmul.f32 %v288, %v11
    %v293 = vmul.f32 %v289, %v12
    %v294 = vsel %vm81, %v290, 0.0
    %v295 = vsel %vm81, %v291, 0.0
    %v296 = vadd.f32 %v294, %v295
    %v297 = vsel %vm81, %v292, 0.0
    %v298 = vadd.f32 %v296, %v297
    %v299 = vsel %vm81, %v293, 0.0
    %v300 = vadd.f32 %v298, %v299
    %v301 = vrot.slane %v300, 4
    %v302 = vadd.f32 %v300, %v301
    %v303 = vrot.slane %v302, 2
    %v304 = vadd.f32 %v302, %v303
    %v305 = vrot.slane %v304, 1
    %v306 = vadd.f32 %v304, %v305
    %v307 = vsub.f32 0.0, %v306
    %v308 = vmin.f32 %v307, 0.0
    %v309 = vand.u32 2147483647, %v307
    %v310 = vsub.f32 0.0, %v309
    %v311 = vmul.f32 %v310, 1.442695
    %v312 = vpow.pop %v311
    %v313 = vadd.f32 %v312, 1.0
    %v314 = vlog2.pop %v313
    %v315 = vmul.f32 %v314, 0.6931472
    %v316 = vmul.f32 -0.5, %v312
    %v317 = vadd.f32 %v316, 1.0
    %v318 = vmul.f32 %v317, %v312
    %v319 = vand.u32 2147483647, %v312
    %vm320 = vcmp.lt.f32.partialorder %v319, 0.0004427343
    %v321 = vsel %vm320, %v318, %v315
    %v322 = vsub.f32 %v308, %v321
    %v323 = vadd.f32 %v285, %v322
    %v324 = vld [vmem:[%s0 + $0x100] sm:$0xff]
    %v325 = vld [vmem:[%s0 + $0x108] sm:$0xff]
    %v326 = vld [vmem:[%s0 + $0x110] sm:$0xff]
    %v327 = vld [vmem:[%s0 + $0x118] sm:$0xff]
    %v328 = vmul.f32 %v324, %v9
    %v329 = vmul.f32 %v325, %v10
    %v330 = vmul.f32 %v326, %v11
    %v331 = vmul.f32 %v327, %v12
    %v332 = vsel %vm81, %v328, 0.0
    %v333 = vsel %vm81, %v329, 0.0
    %v334 = vadd.f32 %v332, %v333
    %v335 = vsel %vm81, %v330, 0.0
    %v336 = vadd.f32 %v334, %v335
    %v337 = vsel %vm81, %v331, 0.0
    %v338 = vadd.f32 %v336, %v337
    %v339 = vrot.slane %v338, 4
    %v340 = vadd.f32 %v338, %v339
    %v341 = vrot.slane %v340, 2
    %v342 = vadd.f32 %v340, %v341
    %v343 = vrot.slane %v342, 1
    %v344 = vadd.f32 %v342, %v343
    %v345 = vsub.f32 0.0, %v344
    %v346 = vmin.f32 %v345, 0.0
    %v347 = vand.u32 2147483647, %v345
    %v348 = vsub.f32 0.0, %v347
    %v349 = vmul.f32 %v348, 1.442695
    %v350 = vpow.pop %v349
    %v351 = vadd.f32 %v350, 1.0
    %v352 = vlog2.pop %v351
    %v353 = vmul.f32 %v352, 0.6931472
    %v354 = vmul.f32 -0.5, %v350
    %v355 = vadd.f32 %v354, 1.0
    %v356 = vmul.f32 %v355, %v350
    %v357 = vand.u32 2147483647, %v350
    %vm358 = vcmp.lt.f32.partialorder %v357, 0.0004427343
    %v359 = vsel %vm358, %v356, %v353
    %v360 = vsub.f32 %v346, %v359
    %v361 = vadd.f32 %v323, %v360
    %v362 = vld [vmem:[%s0 + $0x120] sm:$0xff]
    %v363 = vld [vmem:[%s0 + $0x128] sm:$0xff]
    %v364 = vld [vmem:[%s0 + $0x130] sm:$0xff]
    %v365 = vld [vmem:[%s0 + $0x138] sm:$0xff]
    %v366 = vmul.f32 %v362, %v9
    %v367 = vmul.f32 %v363, %v10
    %v368 = vmul.f32 %v364, %v11
    %v369 = vmul.f32 %v365, %v12
    %v370 = vsel %vm81, %v366, 0.0
    %v371 = vsel %vm81, %v367, 0.0
    %v372 = vadd.f32 %v370, %v371
    %v373 = vsel %vm81, %v368, 0.0
    %v374 = vadd.f32 %v372, %v373
    %v375 = vsel %vm81, %v369, 0.0
    %v376 = vadd.f32 %v374, %v375
    %v377 = vrot.slane %v376, 4
    %v378 = vadd.f32 %v376, %v377
    %v379 = vrot.slane %v378, 2
    %v380 = vadd.f32 %v378, %v379
    %v381 = vrot.slane %v380, 1
    %v382 = vadd.f32 %v380, %v381
    %v383 = vsub.f32 0.0, %v382
    %v384 = vmin.f32 %v383, 0.0
    %v385 = vand.u32 2147483647, %v383
    %v386 = vsub.f32 0.0, %v385
    %v387 = vmul.f32 %v386, 1.442695
    %v388 = vpow.pop %v387
    %v389 = vadd.f32 %v388, 1.0
    %v390 = vlog2.pop %v389
    %v391 = vmul.f32 %v390, 0.6931472
    %v392 = vmul.f32 -0.5, %v388
    %v393 = vadd.f32 %v392, 1.0
    %v394 = vmul.f32 %v393, %v388
    %v395 = vand.u32 2147483647, %v388
    %vm396 = vcmp.lt.f32.partialorder %v395, 0.0004427343
    %v397 = vsel %vm396, %v394, %v391
    %v398 = vsub.f32 %v384, %v397
    %v399 = vadd.f32 %v361, %v398
    %v400 = vadd.f32 %v95, %v399
    %401 = vst.msk [vmem:[#allocation2] sm:$0xff] %vm81, %v400
    // Predicated region
    $region6: #{tpu_custom_call.1} parent=1 // pred_check
      _
    $region7: #{tpu_custom_call.1} parent=1 // pred_check_branch
      %403 = sbr.rel (0) target = $region9
    $region8: #{tpu_custom_call.1} parent=1 // pred_region
      %s405 = ssub.s32 128, 128
      %406 = vsyncadd [#allocation3], %s405
      %s408 = sshll.u32 [#allocation2], 4
      %s409 = int_to_ptr.vmem [resolvable:$true] %s408
      %411 = dma.vmem_to_hbm [thread:$0]  %s409, 128, %s1, [#allocation3]
    $region9: #{tpu_custom_call.1} parent=1 // pred_fallthru
      _
    // Predicated region
    $region10: #{tpu_custom_call.1} parent=1 // pred_check
      _
    $region11: #{tpu_custom_call.1} parent=1 // pred_check_branch
      %413 = sbr.rel (0) target = $region13
    $region12: #{tpu_custom_call.1} parent=1 // pred_region
      %414 = dma.done [#allocation3], 128
    $region13: #{tpu_custom_call.1} parent=1 // pred_fallthru
      _
    %415 = vsyncpa [#allocation3], 1

</llo_original>
